<compile_context>
chip_gen: v6e
topology: v6e:2x2x1
jax: 0.10.0
libtpu: 0.0.40
codegen_flags: <defaults>
</compile_context>

<pallas_src>
import jax
import jax.numpy as jnp
from jax.experimental import pallas as pl
from jax.experimental.pallas import tpu as pltpu


def attention_kernel(x_ref, w_ref, o_ref):
    # x_ref: (TB, S, F) VMEM block of the input
    # w_ref: (1, 1, F)  lane-aligned weight row (grid-invariant, stays resident)
    # o_ref: (TB, F)    output block
    w = w_ref[...]                                        # (1, 1, F)

    # Scores via VPU multiply + lane (F) reduction -> lane-dense (TB, S).
    # (The N=1 MXU matmul of the reference would waste the MXU output path.)
    # Bias omitted: softmax is shift-invariant, so it cannot change the output.
    scores = jnp.sum(x_ref[...] * w, axis=-1)             # (TB, S)

    # Numerically-stable softmax over the step axis (last / lane axis).
    m = jnp.max(scores, axis=-1, keepdims=True)           # (TB, 1)
    e = jnp.exp(scores - m)                               # (TB, S)
    denom = jnp.sum(e, axis=-1, keepdims=True)            # (TB, 1)
    a = e / denom                                         # exact reciprocal: negligible cost, bit-close to reference

    # Weighted sum over steps: (TB, S, F) * (TB, S, 1) -> (TB, F).
    # Re-read x_ref here instead of reusing a single live `x` value so the
    # full tile never has to live across both passes in vregs.
    out = jnp.sum(x_ref[...] * a[:, :, None], axis=1)
    o_ref[...] = out.astype(o_ref.dtype)


def _tpu_vmem_capacity_bytes():
    try:
        return int(pltpu.get_tpu_info().vmem_capacity_bytes)
    except Exception:
        # Conservative default: v7x per-TensorCore VMEM.
        return 64 << 20


def _sizing_for_generation():
    """Return (target_bytes for the x block, vmem_limit_bytes)."""
    vmem = _tpu_vmem_capacity_bytes()
    if vmem >= (96 << 20):
        # v5e / v6e: 128 MiB physical VMEM -> big blocks, high scoped limit.
        return 16 << 20, 96 << 20
    # v7x: 64 MiB per-TC VMEM -> 8 MiB blocks, 56 MiB limit.
    return 8 << 20, 56 << 20


def _pick_block_b(B, S, F, target_bytes):
    """Pick a batch tile TB: (TB,S,F) f32 block ~target_bytes, 8-aligned (or the
    full batch), and capped so large batches keep >=8 grid steps (>=4 per v7x
    TensorCore) for pipelined double-buffering."""
    bytes_per_row = S * F * 4
    max_rows = max(1, target_bytes // bytes_per_row)
    if B >= 64:
        max_rows = min(max_rows, B // 8)
    elif B >= 32:
        max_rows = min(max_rows, B // 4)
    elif B >= 16:
        max_rows = min(max_rows, B // 2)
    if B <= max_rows or B <= 8:
        return B                       # full batch dim: always a legal block
    # 8-aligned sublane block; grid uses cdiv so a ragged last block is masked.
    return max(8, (max_rows // 8) * 8)


def attention_forward(x, weights, bias=None, *, block_b=None):
    """x: (B, S, F) f32, weights: (F, 1) f32, bias: ignored (softmax
    shift-invariance makes it a mathematical no-op) -> (B, F)."""
    del bias  # No effect on the forward output; kept for API parity.
    B, S, F = x.shape
    target_bytes, vmem_limit = _sizing_for_generation()
    if block_b is None:
        block_b = _pick_block_b(B, S, F, target_bytes)
    grid = (pl.cdiv(B, block_b),)

    w_row = jnp.asarray(weights, jnp.float32).reshape(1, 1, F)   # lane-aligned row

    return pl.pallas_call(
        attention_kernel,
        out_shape=jax.ShapeDtypeStruct((B, F), jnp.float32),
        grid_spec=pltpu.PrefetchScalarGridSpec(
            num_scalar_prefetch=0,
            grid=grid,
            in_specs=[
                pl.BlockSpec((block_b, S, F), lambda i: (i, 0, 0)),   # x batch block
                pl.BlockSpec((1, 1, F), lambda i: (0, 0, 0)),         # weight row (resident)
            ],
            out_specs=pl.BlockSpec((block_b, F), lambda i: (i, 0)),
        ),
        compiler_params=pltpu.CompilerParams(
            dimension_semantics=("parallel",),
            vmem_limit_bytes=vmem_limit,
        ),
    )(x, w_row)


def reference_forward(x, weights, bias):
    B, S, F = x.shape
    eij = (jnp.dot(x.reshape(-1, F), weights,
                   precision=jax.lax.Precision.HIGHEST)
           + jnp.asarray(bias).reshape(())).reshape(B, S)
    a = jax.nn.softmax(eij, axis=1)
    return jnp.sum(x * a[..., None], axis=1)


if __name__ == "__main__":
    # Small shapes consistent with the module: batch=2, step_dim=8, feature_dim=32
    # NOTE: at this size a standalone pallas_call is launch-overhead dominated;
    # in a real model this op should be batched/fused. Shapes chosen per spec.
    B, S, F = 2, 8, 32

    key = jax.random.PRNGKey(0)
    kx, kw = jax.random.split(key)

    x = jax.random.normal(kx, (B, S, F), dtype=jnp.float32)

    # Deterministic parameter init mirroring the PyTorch __init__:
    #   nn.init.kaiming_uniform_ on (F, 1): fan_in=1, gain=sqrt(2),
    #   bound = gain * sqrt(3 / fan_in);  nn.init.constant_(bias, 0.1).
    bound = jnp.sqrt(2.0) * jnp.sqrt(3.0)
    weights = jax.random.uniform(kw, (F, 1), dtype=jnp.float32,
                                 minval=-bound, maxval=bound)
    bias = jnp.full((1,), 0.1, dtype=jnp.float32)

    out = attention_forward(x, weights, bias)
    jax.block_until_ready(out)

    ref = reference_forward(x, weights, bias)
    assert out.shape == (B, F)
    assert jnp.allclose(out, ref, atol=1e-4, rtol=1e-4), (
        f"mismatch: max abs err {jnp.max(jnp.abs(out - ref))}")

    print("KERNEL_OK")
</pallas_src>

<mosaic_0001>
module attributes {stable_mosaic.version = 11 : i64} {
  func.func @attention_kernel(%arg0: i32, %arg1: memref<2x8x32xf32, #tpu.memory_space<vmem>>, %arg2: memref<1x1x32xf32, #tpu.memory_space<vmem>>, %arg3: memref<2x32xf32, #tpu.memory_space<vmem>>) attributes {dimension_semantics = [#tpu.dimension_semantics<parallel>], iteration_bounds = array<i64: 1>, scalar_prefetch = 0 : i64, scratch_operands = 0 : i64, tpu.core_type = #tpu.core_type<tc>, window_params = [{transform_indices = @transform_0, window_bounds = array<i64: 2, 8, 32>}, {pipeline_mode = #tpu.pipeline_mode<synchronous>, transform_indices = @transform_1, window_bounds = array<i64: 1, 1, 32>}, {transform_indices = @transform_2, window_bounds = array<i64: 2, 32>}]} {
    %c0 = arith.constant 0 : index
    %c0_0 = arith.constant 0 : index
    %c0_1 = arith.constant 0 : index
    %0 = vector.load %arg2[%c0, %c0_0, %c0_1] : memref<1x1x32xf32, #tpu.memory_space<vmem>>, vector<1x1x32xf32>
    %c0_2 = arith.constant 0 : index
    %c0_3 = arith.constant 0 : index
    %c0_4 = arith.constant 0 : index
    %1 = vector.load %arg1[%c0_2, %c0_3, %c0_4] : memref<2x8x32xf32, #tpu.memory_space<vmem>>, vector<2x8x32xf32>
    %2 = vector.broadcast %0 : vector<1x1x32xf32> to vector<2x8x32xf32>
    %3 = arith.mulf %1, %2 : vector<2x8x32xf32>
    %cst = arith.constant dense<0.000000e+00> : vector<2x8xf32>
    %4 = vector.multi_reduction <add>, %3, %cst [2] : vector<2x8x32xf32> to vector<2x8xf32>
    %cst_5 = arith.constant dense<0xFF800000> : vector<2xf32>
    %5 = vector.multi_reduction <maximumf>, %4, %cst_5 [1] : vector<2x8xf32> to vector<2xf32>
    %6 = vector.shape_cast %5 : vector<2xf32> to vector<2x1xf32>
    %7 = vector.broadcast %6 : vector<2x1xf32> to vector<2x8xf32>
    %8 = arith.subf %4, %7 : vector<2x8xf32>
    %9 = math.exp %8 : vector<2x8xf32>
    %cst_6 = arith.constant dense<0.000000e+00> : vector<2xf32>
    %10 = vector.multi_reduction <add>, %9, %cst_6 [1] : vector<2x8xf32> to vector<2xf32>
    %11 = vector.shape_cast %10 : vector<2xf32> to vector<2x1xf32>
    %12 = vector.broadcast %11 : vector<2x1xf32> to vector<2x8xf32>
    %13 = arith.divf %9, %12 : vector<2x8xf32>
    %c0_7 = arith.constant 0 : index
    %c0_8 = arith.constant 0 : index
    %c0_9 = arith.constant 0 : index
    %14 = vector.load %arg1[%c0_7, %c0_8, %c0_9] : memref<2x8x32xf32, #tpu.memory_space<vmem>>, vector<2x8x32xf32>
    %15 = vector.shape_cast %13 : vector<2x8xf32> to vector<2x8x1xf32>
    %16 = vector.broadcast %15 : vector<2x8x1xf32> to vector<2x8x32xf32>
    %17 = arith.mulf %14, %16 : vector<2x8x32xf32>
    %cst_10 = arith.constant dense<0.000000e+00> : vector<2x32xf32>
    %18 = vector.multi_reduction <add>, %17, %cst_10 [1] : vector<2x8x32xf32> to vector<2x32xf32>
    %c0_11 = arith.constant 0 : index
    %c0_12 = arith.constant 0 : index
    %19 = vector.load %arg3[%c0_11, %c0_12] : memref<2x32xf32, #tpu.memory_space<vmem>>, vector<2x32xf32>
    tpu.vector_store %arg3[%c0_11, %c0_12], %18 {strides = array<i32>} : memref<2x32xf32, #tpu.memory_space<vmem>>, vector<2x32xf32>,
    return
  }
  func.func @transform_0(%arg0: i32) -> (i32, i32, i32) {
    %c0_i32 = arith.constant 0 : i32
    %c0_i32_0 = arith.constant 0 : i32
    %c0_i32_1 = arith.constant 0 : i32
    return %arg0, %c0_i32, %c0_i32_0 : i32, i32, i32
  }
  func.func @transform_1(%arg0: i32) -> (i32, i32, i32) {
    %c0_i32 = arith.constant 0 : i32
    %c0_i32_0 = arith.constant 0 : i32
    %c0_i32_1 = arith.constant 0 : i32
    %c0_i32_2 = arith.constant 0 : i32
    return %c0_i32, %c0_i32_0, %c0_i32_1 : i32, i32, i32
  }
  func.func @transform_2(%arg0: i32) -> (i32, i32) {
    %c0_i32 = arith.constant 0 : i32
    %c0_i32_0 = arith.constant 0 : i32
    return %arg0, %c0_i32 : i32, i32
  }
}

</mosaic_0001>

<llo_original>
// kernel: tpu_custom_call.1
$region0: #{tpu_custom_call.1}
  #allocation0 [shape = 'u32[]', space=smem, size = 0x4, offset = 0x4, fixed_abs, tag = 'smem constant byte address 0x4 - core index']
  #allocation1 [shape = 'u32[144,128]{1,0:T(1,128)}', space=vmem, size = 0x12000, scoped, tag = 'internal scratch']
  %s0 = inlined_call_operand.hbm [shape: f32[2,8,32], index: 0, kind: input, shape index: {}]
  %s1 = inlined_call_operand.vmem [shape: f32[1,1,32], index: 1, kind: input, shape index: {}]
  %s2 = inlined_call_operand.hbm [shape: f32[2,32], index: 2, kind: output, shape index: {}]
  %s3 = sld [smem:[#allocation0]]
  $region22: #{tpu_custom_call.1} parent=0
    _
  %s5 = ssub.s32 1, %s3
  %s6 = scalar_select 0, %s5, %s3
  $region1: #{tpu_custom_call.1} parent=0
    #allocation2 [shape = 'u8[8192]{0}', space=vmem, size = 0x2000, scoped, tag = 'input window, operand 0, single buffered']
    #allocation3 [shape = 's32[1]{0}', space=sflag, size = 0x4, scoped, tag = 'scoped memory for tpu_custom_call.1']
    #allocation4 [shape = 's32[1]{0}', space=sflag, size = 0x4, scoped, tag = 'scoped memory for tpu_custom_call.1']
    #allocation5 [shape = 'u8[1024]{0}', space=vmem, size = 0x400, scoped, tag = 'output window, operand 0, single buffered']
    %7 = vsyncpa [#allocation3], 0
    %8 = vsyncpa [#allocation4], 0
    // Predicated region
    $region2: #{tpu_custom_call.1} parent=1 // pred_check
      _
    $region3: #{tpu_custom_call.1} parent=1 // pred_check_branch
      %10 = sbr.rel (0) target = $region5
    $region4: #{tpu_custom_call.1} parent=1 // pred_region
      %s12 = ssub.s32 256, 256
      %13 = vsyncadd [#allocation3], %s12
      %s14 = sshll.u32 [#allocation2], 4
      %s15 = int_to_ptr.vmem [resolvable:$true] %s14
      %20 = dma.hbm_to_vmem [thread:$0]  %s0, 256, %s15, [#allocation3], 128, 128, 8
    $region5: #{tpu_custom_call.1} parent=1 // pred_fallthru
      _
    // Predicated region
    $region6: #{tpu_custom_call.1} parent=1 // pred_check
      _
    $region7: #{tpu_custom_call.1} parent=1 // pred_check_branch
      %22 = sbr.rel (0) target = $region9
    $region8: #{tpu_custom_call.1} parent=1 // pred_region
      _
    $region9: #{tpu_custom_call.1} parent=1 // pred_fallthru
      _
    // Predicated region
    $region10: #{tpu_custom_call.1} parent=1 // pred_check
      _
    $region11: #{tpu_custom_call.1} parent=1 // pred_check_branch
      %24 = sbr.rel (0) target = $region13
    $region12: #{tpu_custom_call.1} parent=1 // pred_region
      %25 = dma.done [#allocation3], 256
    $region13: #{tpu_custom_call.1} parent=1 // pred_fallthru
      _
    %v26 = vld [vmem:[%s1] sm:$0x1]
    %v27 = vld [vmem:[#allocation2] sm:$0xff]
    %v28 = vld [vmem:[#allocation2 + $0x8] sm:$0xff]
    %v30 = vlaneseq
    %v31 = vshrl.u32 %v30, 7
    %v32 = vsub.s32 0, %v31
    %v33 = vrot.slane %v26, %v32
    %v35 = vmul.f32 %v27, %v33
    %v36 = vmul.f32 %v28, %v33
    %vm37 = vcmask 261120
    %v38 = vsel %vm37, %v35, 0.0
    %39 = vadd.xlane.f32.xlu0 %v38
    %v40 = vpop.xlane.xlu0 %39
    %v41 = vsel %vm37, %v36, 0.0
    %42 = vadd.xlane.f32.xlu0 %v41
    %v43 = vpop.xlane.xlu0 %42
    %v46 = vlaneseq
    %v47 = vand.u32 %v46, 127
    %v48 = vlaneseq
    %v49 = vshrl.u32 %v48, 7
    %v50 = vsub.s32 %v47, %v49
    %v51 = vrot.slane %v40, %v50
    %v52 = vlaneseq
    %v53 = vshrl.u32 %v52, 7
    %v54 = vsub.s32 %v47, %v53
    %v55 = vrot.slane %v43, %v54
    %vm56 = vcmask 1041409
    %v57 = vsel %vm56, %v55, %v51
    %vm59 = vcmask 58368
    %v60 = vsel %vm59, %v57, -inf
    %61 = vmax.xlane.f32.xlu0 %v60
    %v62 = vpop.xlane.xlu0 %61
    %v64 = vlaneseq
    %v65 = vshrl.u32 %v64, 7
    %v66 = vsub.s32 0, %v65
    %v67 = vrot.slane %v62, %v66
    %v68 = vlaneseq
    %v69 = vshrl.u32 %v68, 7
    %v70 = vsub.s32 1, %v69
    %v71 = vrot.slane %v62, %v70
    %v74 = vsub.f32 %v40, %v67
    %v75 = vsub.f32 %v43, %v71
    %v76 = vmul.f32 %v74, 1.442695
    %v77 = vpow.pop %v76
    %v78 = vmul.f32 %v75, 1.442695
    %v79 = vpow.pop %v78
    %82 = vset.pattern.permute.xlu0 0
    %83 = vperm.xlu0 %82, %v77
    %v84 = vpop.permute.xlu0 %83
    %85 = vset.pattern.permute.xlu0 0
    %86 = vperm.xlu0 %85, %v79
    %v87 = vpop.permute.xlu0 %86
    %v88 = vlaneseq
    %v89 = vshrl.u32 %v88, 7
    %v90 = vsub.s32 %v47, %v89
    %v91 = vrot.slane %v84, %v90
    %v92 = vlaneseq
    %v93 = vshrl.u32 %v92, 7
    %v94 = vsub.s32 %v47, %v93
    %v95 = vrot.slane %v87, %v94
    %v96 = vsel %vm56, %v95, %v91
    %v98 = vsel %vm59, %v96, 0.0
    %99 = vadd.xlane.f32.xlu0 %v98
    %v100 = vpop.xlane.xlu0 %99
    %v102 = vlaneseq
    %v103 = vshrl.u32 %v102, 7
    %v104 = vsub.s32 0, %v103
    %v105 = vrot.slane %v100, %v104
    %v106 = vlaneseq
    %v107 = vshrl.u32 %v106, 7
    %v108 = vsub.s32 1, %v107
    %v109 = vrot.slane %v100, %v108
    %v112 = vrcp.pop %v105
    %v113 = vmul.f32 %v77, %v112
    %v114 = vrcp.pop %v109
    %v115 = vmul.f32 %v79, %v114
    %117 = vset.pattern.permute.xlu0 0
    %118 = vperm.xlu0 %117, %v113
    %v119 = vpop.permute.xlu0 %118
    %122 = vset.pattern.permute.xlu0 0
    %123 = vperm.xlu0 %122, %v115
    %v124 = vpop.permute.xlu0 %123
    %v126 = vmul.f32 %v27, %v119
    %v127 = vmul.f32 %v28, %v124
    %v128 = vsel %vm37, %v126, 0.0
    %v129 = vrot.slane %v128, 4
    %v130 = vadd.f32 %v128, %v129
    %v131 = vrot.slane %v130, 2
    %v132 = vadd.f32 %v130, %v131
    %v133 = vrot.slane %v132, 1
    %v134 = vadd.f32 %v132, %v133
    %v135 = vsel %vm37, %v127, 0.0
    %v136 = vrot.slane %v135, 4
    %v137 = vadd.f32 %v135, %v136
    %v138 = vrot.slane %v137, 2
    %v139 = vadd.f32 %v137, %v138
    %v140 = vrot.slane %v139, 1
    %v141 = vadd.f32 %v139, %v140
    %v144 = vsel %vm56, %v141, %v134
    %vm146 = vcmask 254976
    %147 = vst.msk [vmem:[#allocation5] sm:$0x3] %vm146, %v144
    // Predicated region
    $region14: #{tpu_custom_call.1} parent=1 // pred_check
      _
    $region15: #{tpu_custom_call.1} parent=1 // pred_check_branch
      %149 = sbr.rel (0) target = $region17
    $region16: #{tpu_custom_call.1} parent=1 // pred_region
      %s151 = ssub.s32 32, 32
      %152 = vsyncadd [#allocation4], %s151
      %s154 = sshll.u32 [#allocation5], 4
      %s155 = int_to_ptr.vmem [resolvable:$true] %s154
      %157 = dma.vmem_to_hbm [thread:$0]  %s155, 32, %s2, [#allocation4]
    $region17: #{tpu_custom_call.1} parent=1 // pred_fallthru
      _
    // Predicated region
    $region18: #{tpu_custom_call.1} parent=1 // pred_check
      _
    $region19: #{tpu_custom_call.1} parent=1 // pred_check_branch
      %159 = sbr.rel (0) target = $region21
    $region20: #{tpu_custom_call.1} parent=1 // pred_region
      %160 = dma.done [#allocation4], 32
    $region21: #{tpu_custom_call.1} parent=1 // pred_fallthru
      _
    %161 = vsyncpa [#allocation3], 1
    %162 = vsyncpa [#allocation4], 1

</llo_original>
